<compile_context>
chip_gen: v5e
topology: v5e:2x2
jax: 0.10.0
libtpu: 0.0.40
codegen_flags: <defaults>
</compile_context>

<pallas_src>
import jax
import jax.numpy as jnp
from jax.experimental import pallas as pl
from jax.experimental.pallas import tpu as pltpu


def _identity_copy_kernel(img_hbm_ref, out_hbm_ref, copy_sem):
    # Whole-array HBM -> HBM DMA; no VMEM round trip, no grid.
    cp = pltpu.make_async_copy(img_hbm_ref, out_hbm_ref, copy_sem)
    cp.start()
    cp.wait()


def _as_2d(total):
    # Pick a lane-friendly 2D view of the flat image.  This is only a view
    # choice (bitcast reshape); HBM->HBM DMAs have no (8,128) tiling
    # constraint, so any shape works — wide lanes just keep the DMA dense.
    for lane in (512, 256, 128):
        if total % lane == 0:
            return total // lane, lane
    return 1, total


def enhancement_forward(image, parameters):
    """Pallas implementation of EnhancementModule.forward.

    image:      (N, C, H, W) array (NCHW, matching PyTorch)
    parameters: (N, parameters_count) array -- unused by the forward pass,
                exactly as in the reference PyTorch module.
    """
    del parameters  # forward ignores `parameters`, matching the reference

    # TODO(synk): if the calling convention allows it, skip the kernel and
    # return `image` (or alias via input_output_aliases with buffer donation
    # at a jit boundary) — the identity forward then moves zero bytes.

    orig_shape = image.shape
    dtype = image.dtype
    total = 1
    for d in orig_shape:
        total *= d

    rows, lane = _as_2d(total)
    flat2d = image.reshape(rows, lane)  # free (bitcast) for row-major layout

    out2d = pl.pallas_call(
        _identity_copy_kernel,
        out_shape=jax.ShapeDtypeStruct((rows, lane), dtype),
        in_specs=[pl.BlockSpec(memory_space=pl.ANY)],
        out_specs=pl.BlockSpec(memory_space=pl.ANY),
        scratch_shapes=[pltpu.SemaphoreType.DMA],
    )(flat2d)

    return out2d.reshape(orig_shape)


if __name__ == "__main__":
    key = jax.random.PRNGKey(0)
    k_img, k_par = jax.random.split(key)

    # Small shapes consistent with the module's forward signature.
    N, C, H, W = 2, 4, 16, 16
    parameters_count = 8  # deterministic synthetic "parameters" (unused)

    image = jax.random.normal(k_img, (N, C, H, W), dtype=jnp.float32)
    parameters = jax.random.normal(k_par, (N, parameters_count), dtype=jnp.float32)

    out = enhancement_forward(image, parameters)
    out = jax.block_until_ready(out)

    # Correctness: exact identity on `image`, parameters ignored.
    assert out.shape == image.shape
    assert out.dtype == image.dtype
    assert bool(jnp.array_equal(out, image))

    print("KERNEL_OK")
</pallas_src>

<mosaic_0001>
module attributes {stable_mosaic.version = 11 : i64} {
  func.func @_identity_copy_kernel(%arg0: memref<4x512xf32, #tpu.memory_space<any>>, %arg1: memref<4x512xf32, #tpu.memory_space<any>>, %arg2: memref<!tpu.dma_semaphore, #tpu.memory_space<semaphore_mem>>) attributes {dimension_semantics = [], scalar_prefetch = 0 : i64, scratch_operands = 1 : i64, tpu.core_type = #tpu.core_type<tc>} {
    tpu.enqueue_dma source(%arg0 : memref<4x512xf32, #tpu.memory_space<any>>) target(%arg1 : memref<4x512xf32, #tpu.memory_space<any>>) target_semaphore(%arg2 : memref<!tpu.dma_semaphore, #tpu.memory_space<semaphore_mem>>)
    tpu.wait_dma2 semaphore(%arg2 : memref<!tpu.dma_semaphore, #tpu.memory_space<semaphore_mem>>) src(%arg0 : memref<4x512xf32, #tpu.memory_space<any>>) dst(%arg1 : memref<4x512xf32, #tpu.memory_space<any>>)
    return
  }
}

</mosaic_0001>

<llo_original>
// kernel: tpu_custom_call.1
$region0: #{tpu_custom_call.1}
  #allocation0 [shape = 'u32[]', space=smem, size = 0x4, offset = 0x4, fixed_abs, tag = 'smem constant byte address 0x4 - core index']
  #allocation1 [shape = 'u32[72,128]{1,0:T(1,128)}', space=vmem, size = 0x9000, scoped, tag = 'internal scratch']
  #allocation2 [shape = 's32[1]{0}', space=sflag, size = 0x4, scoped, tag = 'scratch operand']
  #allocation3 [shape = 's32[]', space=sflag, size = 0x4, offset = 0, fixed_abs, tag = 'sflag constant byte address 0x0 - dummy sync flag']
  #allocation4 [shape = 'u32[0]{0}', space=smem, size = 0, offset = 0, fixed_abs, tag = 'smem constant byte address 0x0 - null']
  %s0 = inlined_call_operand.hbm [shape: f32[4,512], index: 0, kind: input, shape index: {}]
  %s1 = inlined_call_operand.hbm [shape: f32[4,512], index: 1, kind: output, shape index: {}]
  %s2 = sld [smem:[#allocation0]]
  $region2: #{tpu_custom_call.1} parent=0
    _
  %s4 = ssub.s32 1, %s2
  %s5 = scalar_select 0, %s4, %s2
  %s7 = sshll.u32 1, 14
  %s8 = sxor.u32 4294967295, %s7
  %s10 = sshll.u32 %s0, 4
  %s11 = int_to_ptr.hbm [resolvable:$true] %s10
  %s12 = sshll.u32 %s1, 4
  %s13 = int_to_ptr.hbm [resolvable:$true] %s12
  %16 = dma.general %s11, 256, %s13, [#allocation2], [#allocation3], [#allocation4], 0, 0
  %s17 = smul.u32 4, 1
  %s18 = smul.u32 %s17, 4
  %s19 = sshll.u32 %s18, 4
  %20 = dma.done [#allocation2], %s19
  %21 = vsyncmov [#allocation2]
  %s22 = vpop.sfrf %21
  %p23 = scmp.eq.s32.totalorder %s22, 0
  %p24 = pneg %p23
  %26 = shalt.err (%p24)

</llo_original>
